<compile_context>
chip_gen: v7x
topology: tpu7x:2x2x1
jax: 0.10.0
libtpu: 0.0.40
codegen_flags: <defaults>
</compile_context>

<pallas_src>
import functools

import jax
import jax.numpy as jnp
from jax.experimental import pallas as pl
from jax.experimental.pallas import tpu as pltpu


def make_decoder_kernel(n_layers: int):
    """Builds a kernel: (x, [W_i, b_i] * n_layers, out) -> out.

    Layers 0 .. n_layers-2 are followed by ReLU; the last layer by sigmoid.
    Weights are bf16 (in, out); biases are f32 (1, out); accumulation is f32.
    """

    def kernel(*refs):
        x_ref = refs[0]
        layer_refs = refs[1:1 + 2 * n_layers]
        out_ref = refs[1 + 2 * n_layers]

        h = x_ref[...]  # (tm, latent) bf16
        for i in range(n_layers):
            w = layer_refs[2 * i][...]        # (in, out) bf16
            b = layer_refs[2 * i + 1][...]    # (1, out)  f32
            z = jnp.dot(h.astype(jnp.bfloat16), w,
                        preferred_element_type=jnp.float32) + b
            if i < n_layers - 1:
                h = jnp.maximum(z, 0.0)                      # ReLU (f32, VPU)
            else:
                out_ref[...] = jax.nn.sigmoid(z).astype(out_ref.dtype)

    return kernel


@functools.partial(jax.jit, static_argnames=("depth", "block_rows"))
def decoder_forward(x, wr, br, hidden_ws, hidden_bs, *, depth: int,
                    block_rows: int = 128):
    """x: (B, latent_dim) f32. Weights are (in, out); biases are (1, out)."""
    # --- Algebraic fusion: restored ∘ hidden[0] (linear-linear, f32 precompute)
    w_fused = jnp.dot(wr, hidden_ws[0], preferred_element_type=jnp.float32)
    b_fused = jnp.dot(br, hidden_ws[0], preferred_element_type=jnp.float32) \
        + hidden_bs[0]

    layer_ws = [w_fused] + list(hidden_ws[1:])
    layer_bs = [b_fused] + list(hidden_bs[1:])
    n_layers = len(layer_ws)  # == depth

    # bf16 operands for the MXU; biases / elementwise stay f32.
    layer_ws = [w.astype(jnp.bfloat16) for w in layer_ws]
    layer_bs = [b.astype(jnp.float32) for b in layer_bs]
    x_bf16 = x.astype(jnp.bfloat16)

    batch, latent = x.shape
    out_features = layer_ws[-1].shape[1]

    # Batch tile: 128 rows when divisible, otherwise fall back to full batch
    # (tiny batches -> single grid step, still a valid full-extent block).
    tm = block_rows if (batch % block_rows == 0 and batch >= block_rows) else batch
    grid = (batch // tm,)

    in_specs = [pl.BlockSpec((tm, latent), lambda i: (i, 0))]
    inputs = [x_bf16]
    for w, b in zip(layer_ws, layer_bs):
        in_specs.append(pl.BlockSpec(w.shape, lambda i: (0, 0)))  # VMEM-resident
        in_specs.append(pl.BlockSpec(b.shape, lambda i: (0, 0)))
        inputs += [w, b]
    out_specs = pl.BlockSpec((tm, out_features), lambda i: (i, 0))

    flops = 2 * batch * sum(int(w.shape[0]) * int(w.shape[1]) for w in layer_ws)
    bytes_accessed = (
        x_bf16.size * x_bf16.dtype.itemsize
        + sum(int(w.size) * w.dtype.itemsize for w in layer_ws)
        + sum(int(b.size) * b.dtype.itemsize for b in layer_bs)
        + batch * out_features * 4)
    cost = pl.CostEstimate(flops=flops,
                           transcendentals=batch * out_features,
                           bytes_accessed=bytes_accessed)

    kernel = make_decoder_kernel(n_layers)
    return pl.pallas_call(
        kernel,
        out_shape=jax.ShapeDtypeStruct((batch, out_features), jnp.float32),
        grid=grid,
        in_specs=in_specs,
        out_specs=out_specs,
        compiler_params=pltpu.CompilerParams(
            dimension_semantics=("parallel",)),
        cost_estimate=cost,
    )(*inputs)


def init_linear(key, in_f, out_f):
    """PyTorch nn.Linear default init, weight returned pre-transposed (in, out)."""
    k = 1.0 / jnp.sqrt(jnp.float32(in_f))
    kw, kb = jax.random.split(key)
    w = jax.random.uniform(kw, (in_f, out_f), jnp.float32, minval=-k, maxval=k)
    b = jax.random.uniform(kb, (1, out_f), jnp.float32, minval=-k, maxval=k)
    return w, b


def reference_forward(x, wr, br, hidden_ws, hidden_bs, depth):
    """Unfused f32 reference matching the PyTorch module exactly."""
    h = x @ wr + br
    for i in range(depth - 1):
        h = jnp.maximum(h @ hidden_ws[i] + hidden_bs[i], 0.0)
    h = h @ hidden_ws[depth - 1] + hidden_bs[depth - 1]
    return jax.nn.sigmoid(h)


if __name__ == "__main__":
    # Module hyperparameters (consistent with the PyTorch __init__).
    output_shape = 128
    latent_dim = 32
    depth = 2
    batch = 256  # two 128-row grid steps to exercise the batch pipeline

    key = jax.random.PRNGKey(0)
    k_x, k_r, *k_h = jax.random.split(key, 2 + depth)

    # restored: latent_dim -> output_shape / 2**depth
    wr, br = init_linear(k_r, latent_dim, output_shape // (2 ** depth))

    # hidden[j] (built with i = depth-1-j): output_shape/2**(i+1) -> output_shape/2**i
    hidden_ws, hidden_bs = [], []
    for j in range(depth):
        i = depth - 1 - j
        in_f = output_shape // (2 ** (i + 1))
        out_f = output_shape // (2 ** i)
        w, b = init_linear(k_h[j], in_f, out_f)
        hidden_ws.append(w)
        hidden_bs.append(b)

    x = jax.random.normal(k_x, (batch, latent_dim), jnp.float32)

    out = decoder_forward(x, wr, br, tuple(hidden_ws), tuple(hidden_bs),
                          depth=depth)
    out = jax.block_until_ready(out)

    ref = reference_forward(x, wr, br, hidden_ws, hidden_bs, depth)
    assert out.shape == (batch, output_shape)
    # bf16 operands + exact-in-f32 layer fusion: compare against the f32
    # reference with a tolerance covering bf16 rounding (sigmoid-bounded).
    max_err = float(jnp.max(jnp.abs(out - ref)))
    assert max_err < 2e-2, f"mismatch vs reference: max_err={max_err}"

    print("KERNEL_OK")
</pallas_src>

<mosaic_0001>
module attributes {stable_mosaic.version = 11 : i64} {
  func.func @kernel(%arg0: i32, %arg1: memref<128x32xbf16, #tpu.memory_space<vmem>>, %arg2: memref<32x64xbf16, #tpu.memory_space<vmem>>, %arg3: memref<1x64xf32, #tpu.memory_space<vmem>>, %arg4: memref<64x128xbf16, #tpu.memory_space<vmem>>, %arg5: memref<1x128xf32, #tpu.memory_space<vmem>>, %arg6: memref<128x128xf32, #tpu.memory_space<vmem>>) attributes {dimension_semantics = [#tpu.dimension_semantics<parallel>], iteration_bounds = array<i64: 2>, scalar_prefetch = 0 : i64, scratch_operands = 0 : i64, tpu.core_type = #tpu.core_type<tc>, window_params = [{transform_indices = @transform_0, window_bounds = array<i64: 128, 32>}, {pipeline_mode = #tpu.pipeline_mode<synchronous>, transform_indices = @transform_1, window_bounds = array<i64: 32, 64>}, {pipeline_mode = #tpu.pipeline_mode<synchronous>, transform_indices = @transform_2, window_bounds = array<i64: 1, 64>}, {pipeline_mode = #tpu.pipeline_mode<synchronous>, transform_indices = @transform_3, window_bounds = array<i64: 64, 128>}, {pipeline_mode = #tpu.pipeline_mode<synchronous>, transform_indices = @transform_4, window_bounds = array<i64: 1, 128>}, {transform_indices = @transform_5, window_bounds = array<i64: 128, 128>}]} {
    %c0 = arith.constant 0 : index
    %c0_0 = arith.constant 0 : index
    %0 = vector.load %arg1[%c0, %c0_0] : memref<128x32xbf16, #tpu.memory_space<vmem>>, vector<128x32xbf16>
    %c0_1 = arith.constant 0 : index
    %c0_2 = arith.constant 0 : index
    %1 = vector.load %arg2[%c0_1, %c0_2] : memref<32x64xbf16, #tpu.memory_space<vmem>>, vector<32x64xbf16>
    %c0_3 = arith.constant 0 : index
    %c0_4 = arith.constant 0 : index
    %2 = vector.load %arg3[%c0_3, %c0_4] : memref<1x64xf32, #tpu.memory_space<vmem>>, vector<1x64xf32>
    %cst = arith.constant dense<0.000000e+00> : vector<128x64xf32>
    %3 = tpu.matmul %0, %1, %cst {dimension_numbers = #tpu.dot_dimension_numbers<[1], [0], [0], [1], [0, 0, 1, 1], [], []>} : vector<128x32xbf16>, vector<32x64xbf16>, vector<128x64xf32> -> vector<128x64xf32>
    %4 = vector.broadcast %2 : vector<1x64xf32> to vector<128x64xf32>
    %5 = arith.addf %3, %4 : vector<128x64xf32>
    %cst_5 = arith.constant 0.000000e+00 : f32
    %6 = vector.broadcast %cst_5 : f32 to vector<128x64xf32>
    %7 = arith.maximumf %5, %6 : vector<128x64xf32>
    %c0_6 = arith.constant 0 : index
    %c0_7 = arith.constant 0 : index
    %8 = vector.load %arg4[%c0_6, %c0_7] : memref<64x128xbf16, #tpu.memory_space<vmem>>, vector<64x128xbf16>
    %c0_8 = arith.constant 0 : index
    %c0_9 = arith.constant 0 : index
    %9 = vector.load %arg5[%c0_8, %c0_9] : memref<1x128xf32, #tpu.memory_space<vmem>>, vector<1x128xf32>
    %10 = arith.truncf %7 : vector<128x64xf32> to vector<128x64xbf16>
    %cst_10 = arith.constant dense<0.000000e+00> : vector<128x128xf32>
    %11 = tpu.matmul %10, %8, %cst_10 {dimension_numbers = #tpu.dot_dimension_numbers<[1], [0], [0], [1], [0, 0, 1, 1], [], []>} : vector<128x64xbf16>, vector<64x128xbf16>, vector<128x128xf32> -> vector<128x128xf32>
    %12 = vector.broadcast %9 : vector<1x128xf32> to vector<128x128xf32>
    %13 = arith.addf %11, %12 : vector<128x128xf32>
    %14 = arith.negf %13 : vector<128x128xf32>
    %15 = math.exp %14 : vector<128x128xf32>
    %cst_11 = arith.constant 1.000000e+00 : f32
    %16 = vector.broadcast %cst_11 : f32 to vector<128x128xf32>
    %17 = arith.addf %16, %15 : vector<128x128xf32>
    %18 = arith.divf %16, %17 : vector<128x128xf32>
    %c0_12 = arith.constant 0 : index
    %c0_13 = arith.constant 0 : index
    %19 = vector.load %arg6[%c0_12, %c0_13] : memref<128x128xf32, #tpu.memory_space<vmem>>, vector<128x128xf32>
    tpu.vector_store %arg6[%c0_12, %c0_13], %18 {strides = array<i32>} : memref<128x128xf32, #tpu.memory_space<vmem>>, vector<128x128xf32>,
    return
  }
  func.func @transform_0(%arg0: i32) -> (i32, i32) {
    %c0_i32 = arith.constant 0 : i32
    %c0_i32_0 = arith.constant 0 : i32
    return %arg0, %c0_i32 : i32, i32
  }
  func.func @transform_1(%arg0: i32) -> (i32, i32) {
    %c0_i32 = arith.constant 0 : i32
    %c0_i32_0 = arith.constant 0 : i32
    %c0_i32_1 = arith.constant 0 : i32
    return %c0_i32, %c0_i32_0 : i32, i32
  }
  func.func @transform_2(%arg0: i32) -> (i32, i32) {
    %c0_i32 = arith.constant 0 : i32
    %c0_i32_0 = arith.constant 0 : i32
    %c0_i32_1 = arith.constant 0 : i32
    return %c0_i32, %c0_i32_0 : i32, i32
  }
  func.func @transform_3(%arg0: i32) -> (i32, i32) {
    %c0_i32 = arith.constant 0 : i32
    %c0_i32_0 = arith.constant 0 : i32
    %c0_i32_1 = arith.constant 0 : i32
    return %c0_i32, %c0_i32_0 : i32, i32
  }
  func.func @transform_4(%arg0: i32) -> (i32, i32) {
    %c0_i32 = arith.constant 0 : i32
    %c0_i32_0 = arith.constant 0 : i32
    %c0_i32_1 = arith.constant 0 : i32
    return %c0_i32, %c0_i32_0 : i32, i32
  }
  func.func @transform_5(%arg0: i32) -> (i32, i32) {
    %c0_i32 = arith.constant 0 : i32
    %c0_i32_0 = arith.constant 0 : i32
    return %arg0, %c0_i32 : i32, i32
  }
}

</mosaic_0001>

<llo_original>
// kernel: decoder_forward.1
$region0: #{decoder_forward.1}
  #allocation0 [shape = 'u32[]', space=smem, size = 0x4, offset = 0x4, fixed_abs, tag = 'smem constant byte address 0x4 - core index']
  #allocation1 [shape = 'u32[144,128]{1,0:T(1,128)}', space=vmem, size = 0x12000, scoped, tag = 'internal scratch']
  %s0 = inlined_call_operand.vmem [shape: bf16[256,32], index: 0, kind: input, shape index: {}]
  %s1 = inlined_call_operand.vmem [shape: bf16[32,64], index: 1, kind: input, shape index: {}]
  %s2 = inlined_call_operand.vmem [shape: f32[1,64], index: 2, kind: input, shape index: {}]
  %s3 = inlined_call_operand.vmem [shape: bf16[64,128], index: 3, kind: input, shape index: {}]
  %s4 = inlined_call_operand.vmem [shape: f32[1,128], index: 4, kind: input, shape index: {}]
  %s5 = inlined_call_operand.hbm [shape: f32[256,128], index: 5, kind: output, shape index: {}]
  %s6 = sld [smem:[#allocation0]]
  $region53: #{decoder_forward.1} parent=0
    _
  %s8 = ssub.s32 1, %s6
  %s9 = scalar_select 0, %s8, %s6
  $region1: #{decoder_forward.1} parent=0
    #allocation2 [shape = 'u8[131072]{0}', space=vmem, size = 0x20000, scoped, tag = 'output window, operand 0']
    #allocation3 [shape = 's32[2]{0}', space=sflag, size = 0x8, scoped, tag = 'scoped memory for decoder_forward.1']
    %10 = vsyncpa [#allocation3], 0
    %s11 = scalar_lea.sflag [#allocation3], 1
    %12 = vsyncpa %s11, 0
    loop: start=0, step=1, limit=4
    $region2: #{decoder_forward.1} parent=1 // loop_pre_header
      _
    $region3: #{decoder_forward.1} parent=1 // loop_header
      %s14 = sphi 0, %s18
      %p15 = scmp.ge.s32.totalorder %s14, 4
      %s24 = sphi 0, %s26
      %s27 = sphi 0, %s24
      %s28 = sphi 0, %s27
      %s44 = sphi 0, %s28
      %s48 = sphi 0, %s48
      %s50 = sphi 0, %s48
      %s51 = sphi 0, %s50
      %s65 = sphi 0, %s51
      %s69 = sphi 0, %s69
      %s71 = sphi 0, %s69
      %s72 = sphi 0, %s71
      %s86 = sphi 0, %s72
      %s90 = sphi 0, %s90
      %s92 = sphi 0, %s90
      %s93 = sphi 0, %s92
      %s107 = sphi 0, %s93
      %s111 = sphi 0, %s111
      %s113 = sphi 0, %s111
      %s114 = sphi 0, %s113
      %s128 = sphi 0, %s114
      %s134 = sphi 0, %s136
      %s137 = sphi 0, %s134
      %s138 = sphi 0, %s137
      %s154 = sphi 0, %s138
    $region4: #{decoder_forward.1} parent=1 // loop_header_branch
      %17 = sbr.rel (%p15) target = $region8
    $region5: #{decoder_forward.1} parent=1 // loop_body
      %s19 = ssub.s32 %s14, 1
      %s20 = ssub.s32 %s14, 2
      %s21 = sadd.s32 %s14, 1
      %s22 = ssub.s32 %s14, %s21
      %p23 = scmp.eq.s32.totalorder %s22, 0
      %s25 = sadd.s32 %s24, 1
      %s26 = scalar_select %p23, %s24, %s25
      %p29 = pneg %p23
      %p30 = scmp.eq.s32.totalorder %s14, 1
      %p31 = por %p29, %p30
      %p32 = scmp.ne.s32.totalorder %s24, %s27
      %p33 = scmp.eq.s32.totalorder %s14, 0
      %p34 = por %p32, %p33
      %p35 = scmp.ne.s32.totalorder %s24, %s27
      %p36 = scmp.eq.s32.totalorder %s19, 1
      %p37 = por %p35, %p36
      %p38 = scmp.ne.s32.totalorder %s27, %s28
      %p39 = scmp.eq.s32.totalorder %s19, 0
      %p40 = por %p38, %p39
      %p41 = scmp.ne.s32.totalorder %s27, %s28
      %p42 = scmp.eq.s32.totalorder %s20, 1
      %p43 = por %p41, %p42
      %p45 = scmp.ne.s32.totalorder %s28, %s44
      %p46 = scmp.eq.s32.totalorder %s20, 0
      %p47 = por %p45, %p46
      %s49 = sadd.s32 %s48, 1
      %p52 = scmp.eq.s32.totalorder %s14, 1
      %p53 = scmp.ne.s32.totalorder %s48, %s50
      %p54 = scmp.eq.s32.totalorder %s14, 0
      %p55 = por %p53, %p54
      %p56 = scmp.ne.s32.totalorder %s48, %s50
      %p57 = scmp.eq.s32.totalorder %s19, 1
      %p58 = por %p56, %p57
      %p59 = scmp.ne.s32.totalorder %s50, %s51
      %p60 = scmp.eq.s32.totalorder %s19, 0
      %p61 = por %p59, %p60
      %p62 = scmp.ne.s32.totalorder %s50, %s51
      %p63 = scmp.eq.s32.totalorder %s20, 1
      %p64 = por %p62, %p63
      %p66 = scmp.ne.s32.totalorder %s51, %s65
      %p67 = scmp.eq.s32.totalorder %s20, 0
      %p68 = por %p66, %p67
      %s70 = sadd.s32 %s69, 1
      %p73 = scmp.eq.s32.totalorder %s14, 1
      %p74 = scmp.ne.s32.totalorder %s69, %s71
      %p75 = scmp.eq.s32.totalorder %s14, 0
      %p76 = por %p74, %p75
      %p77 = scmp.ne.s32.totalorder %s69, %s71
      %p78 = scmp.eq.s32.totalorder %s19, 1
      %p79 = por %p77, %p78
      %p80 = scmp.ne.s32.totalorder %s71, %s72
      %p81 = scmp.eq.s32.totalorder %s19, 0
      %p82 = por %p80, %p81
      %p83 = scmp.ne.s32.totalorder %s71, %s72
      %p84 = scmp.eq.s32.totalorder %s20, 1
      %p85 = por %p83, %p84
      %p87 = scmp.ne.s32.totalorder %s72, %s86
      %p88 = scmp.eq.s32.totalorder %s20, 0
      %p89 = por %p87, %p88
      %s91 = sadd.s32 %s90, 1
      %p94 = scmp.eq.s32.totalorder %s14, 1
      %p95 = scmp.ne.s32.totalorder %s90, %s92
      %p96 = scmp.eq.s32.totalorder %s14, 0
      %p97 = por %p95, %p96
      %p98 = scmp.ne.s32.totalorder %s90, %s92
      %p99 = scmp.eq.s32.totalorder %s19, 1
      %p100 = por %p98, %p99
      %p101 = scmp.ne.s32.totalorder %s92, %s93
      %p102 = scmp.eq.s32.totalorder %s19, 0
      %p103 = por %p101, %p102
      %p104 = scmp.ne.s32.totalorder %s92, %s93
      %p105 = scmp.eq.s32.totalorder %s20, 1
      %p106 = por %p104, %p105
      %p108 = scmp.ne.s32.totalorder %s93, %s107
      %p109 = scmp.eq.s32.totalorder %s20, 0
      %p110 = por %p108, %p109
      %s112 = sadd.s32 %s111, 1
      %p115 = scmp.eq.s32.totalorder %s14, 1
      %p116 = scmp.ne.s32.totalorder %s111, %s113
      %p117 = scmp.eq.s32.totalorder %s14, 0
      %p118 = por %p116, %p117
      %p119 = scmp.ne.s32.totalorder %s111, %s113
      %p120 = scmp.eq.s32.totalorder %s19, 1
      %p121 = por %p119, %p120
      %p122 = scmp.ne.s32.totalorder %s113, %s114
      %p123 = scmp.eq.s32.totalorder %s19, 0
      %p124 = por %p122, %p123
      %p125 = scmp.ne.s32.totalorder %s113, %s114
      %p126 = scmp.eq.s32.totalorder %s20, 1
      %p127 = por %p125, %p126
      %p129 = scmp.ne.s32.totalorder %s114, %s128
      %p130 = scmp.eq.s32.totalorder %s20, 0
      %p131 = por %p129, %p130
      %s132 = ssub.s32 %s14, %s21
      %p133 = scmp.eq.s32.totalorder %s132, 0
      %s135 = sadd.s32 %s134, 1
      %s136 = scalar_select %p133, %s134, %s135
      %p139 = pneg %p133
      %p140 = scmp.eq.s32.totalorder %s14, 1
      %p141 = por %p139, %p140
      %p142 = scmp.ne.s32.totalorder %s134, %s137
      %p143 = scmp.eq.s32.totalorder %s14, 0
      %p144 = por %p142, %p143
      %p145 = scmp.ne.s32.totalorder %s134, %s137
      %p146 = scmp.eq.s32.totalorder %s19, 1
      %p147 = por %p145, %p146
      %p148 = scmp.ne.s32.totalorder %s137, %s138
      %p149 = scmp.eq.s32.totalorder %s19, 0
      %p150 = por %p148, %p149
      %p151 = scmp.ne.s32.totalorder %s137, %s138
      %p152 = scmp.eq.s32.totalorder %s20, 1
      %p153 = por %p151, %p152
      %p155 = scmp.ne.s32.totalorder %s138, %s154
      %p156 = scmp.eq.s32.totalorder %s20, 0
      %p157 = por %p155, %p156
      %p158 = scmp.le.s32.totalorder 1, %s14
      %p159 = scmp.lt.s32.totalorder %s14, 3
      %p160 = pnand %p158, %p159
      %p161 = pneg %p160
      // Predicated region
      $region9: #{decoder_forward.1} parent=5 // pred_check
        _
      $region10: #{decoder_forward.1} parent=5 // pred_check_branch
        %163 = sbr.rel (%p160) target = $region12
      $region11: #{decoder_forward.1} parent=5 // pred_region
        %s164 = ssub.s32 %s14, 1
        // Predicated region
        $region13: #{decoder_forward.1} parent=11 // pred_check
          %p165 = pneg %p61
        $region14: #{decoder_forward.1} parent=11 // pred_check_branch
          %167 = sbr.rel (%p165) target = $region16
        $region15: #{decoder_forward.1} parent=11 // pred_region
          _
        $region16: #{decoder_forward.1} parent=11 // pred_fallthru
          _
        // Predicated region
        $region17: #{decoder_forward.1} parent=11 // pred_check
          %p168 = pneg %p82
        $region18: #{decoder_forward.1} parent=11 // pred_check_branch
          %170 = sbr.rel (%p168) target = $region20
        $region19: #{decoder_forward.1} parent=11 // pred_region
          _
        $region20: #{decoder_forward.1} parent=11 // pred_fallthru
          _
        // Predicated region
        $region21: #{decoder_forward.1} parent=11 // pred_check
          %p171 = pneg %p103
        $region22: #{decoder_forward.1} parent=11 // pred_check_branch
          %173 = sbr.rel (%p171) target = $region24
        $region23: #{decoder_forward.1} parent=11 // pred_region
          _
        $region24: #{decoder_forward.1} parent=11 // pred_fallthru
          _
        // Predicated region
        $region25: #{decoder_forward.1} parent=11 // pred_check
          %p174 = pneg %p124
        $region26: #{decoder_forward.1} parent=11 // pred_check_branch
          %176 = sbr.rel (%p174) target = $region28
        $region27: #{decoder_forward.1} parent=11 // pred_region
          _
        $region28: #{decoder_forward.1} parent=11 // pred_fallthru
          _
      $region12: #{decoder_forward.1} parent=5 // pred_fallthru
        _
      %p177 = scmp.lt.s32.totalorder %s14, 2
      // Predicated region
      $region29: #{decoder_forward.1} parent=5 // pred_check
        %p178 = pneg %p177
      $region30: #{decoder_forward.1} parent=5 // pred_check_branch
        %180 = sbr.rel (%p178) target = $region32
      $region31: #{decoder_forward.1} parent=5 // pred_region
        // Predicated region
        $region33: #{decoder_forward.1} parent=31 // pred_check
          %p181 = pneg %p34
        $region34: #{decoder_forward.1} parent=31 // pred_check_branch
          %183 = sbr.rel (%p181) target = $region36
        $region35: #{decoder_forward.1} parent=31 // pred_region
          %s184 = smul.u32 16, %s14
          %p185 = scmp.lt.s32.totalorder %s184, 31
          %s186 = scalar_select %p185, %s184, 31
          %s187 = smul.addr %s186, 4
          %s188 = scalar_lea.vmem %s0, %s187
          %s189 = smul.u32 16, %s14
        $region36: #{decoder_forward.1} parent=31 // pred_fallthru
          _
      $region32: #{decoder_forward.1} parent=5 // pred_fallthru
        _
      %p190 = scmp.le.s32.totalorder 1, %s14
      %p191 = scmp.lt.s32.totalorder %s14, 3
      %p192 = pnand %p190, %p191
      %p193 = pneg %p192
      // Predicated region
      $region37: #{decoder_forward.1} parent=5 // pred_check
        _
      $region38: #{decoder_forward.1} parent=5 // pred_check_branch
        %195 = sbr.rel (%p192) target = $region40
      $region39: #{decoder_forward.1} parent=5 // pred_region
        %s196 = ssub.s32 %s14, 1
        %s197 = smul.u32 16, %s19
        %p198 = scmp.lt.s32.totalorder %s197, 31
        %s199 = scalar_select %p198, %s197, 31
        %s200 = smul.addr %s199, 4
        %s201 = scalar_lea.vmem %s0, %s200
        %p202 = pneg %p40
        %p203 = pneg %p37
        %p204 = pneg %p61
        %p205 = pneg %p58
        %p206 = pneg %p82
        %p207 = pneg %p79
        %p208 = pneg %p103
        %p209 = pneg %p100
        %p210 = pneg %p124
        %p211 = pneg %p121
        %p212 = pneg %p150
        %p213 = pneg %p147
        %s214 = sand.u32 %s137, 1
        %s215 = scalar_lea.sflag [#allocation3], %s214
        %s216 = sand.u32 %s137, 1
        %s217 = smul.addr %s216, 128
        %s218 = scalar_lea.vmem [#allocation2], %s217
        %s219 = smul.u32 16, %s19
        %p220 = scmp.lt.s32.totalorder %s219, 31
        %s221 = scalar_select %p220, %s219, 31
        %s222 = smul.addr %s221, 4
        %s223 = scalar_lea.vmem %s0, %s222
        %s224 = smul.u32 16, %s19
        %s225 = smul.u32 16, %s19
        %v227 = vld [vmem:[%s223] sm:$0xf]
        %v228 = vld [vmem:[%s223 + $0x4] sm:$0xf]
        %v229 = vld [vmem:[%s223 + $0x8] sm:$0xf]
        %v230 = vld [vmem:[%s223 + $0xc] sm:$0xf]
        %v231 = vld [vmem:[%s223 + $0x10] sm:$0xf]
        %v232 = vld [vmem:[%s223 + $0x14] sm:$0xf]
        %v233 = vld [vmem:[%s223 + $0x18] sm:$0xf]
        %v234 = vld [vmem:[%s223 + $0x1c] sm:$0xf]
        %v235 = vld [vmem:[%s223 + $0x20] sm:$0xf]
        %v236 = vld [vmem:[%s223 + $0x24] sm:$0xf]
        %v237 = vld [vmem:[%s223 + $0x28] sm:$0xf]
        %v238 = vld [vmem:[%s223 + $0x2c] sm:$0xf]
        %v239 = vld [vmem:[%s223 + $0x30] sm:$0xf]
        %v240 = vld [vmem:[%s223 + $0x34] sm:$0xf]
        %v241 = vld [vmem:[%s223 + $0x38] sm:$0xf]
        %v242 = vld [vmem:[%s223 + $0x3c] sm:$0xf]
        %v243 = vld [vmem:[%s1] sm:$0xf]
        %v244 = vld [vmem:[%s1 + $0x4] sm:$0xf]
        %v245 = vld [vmem:[%s1 + $0x8] sm:$0xf]
        %v246 = vld [vmem:[%s1 + $0xc] sm:$0xf]
        %v247 = vld [vmem:[%s2] sm:$0x1]
        %v249 = vlaneseq
        %v250 = vshrl.u32 %v249, 7
        %v251 = vsub.s32 0, %v250
        %v252 = vrot.slane %v247, %v251
        %v270 = vunpack.c.l.b16 %v227
        %v271 = vunpack.c.l.b16 %v228
        %v272 = vunpack.c.l.b16 %v229
        %v273 = vunpack.c.l.b16 %v230
        %v274 = vunpack.c.l.b16 %v231
        %v275 = vunpack.c.l.b16 %v232
        %v276 = vunpack.c.l.b16 %v233
        %v277 = vunpack.c.l.b16 %v234
        %v278 = vunpack.c.l.b16 %v235
        %v279 = vunpack.c.l.b16 %v236
        %v280 = vunpack.c.l.b16 %v237
        %v281 = vunpack.c.l.b16 %v238
        %v282 = vunpack.c.l.b16 %v239
        %v283 = vunpack.c.l.b16 %v240
        %v284 = vunpack.c.l.b16 %v241
        %v285 = vunpack.c.l.b16 %v242
        %v286 = vpack.c.b16 %v271, %v270
        %v287 = vpack.c.b16 %v273, %v272
        %v288 = vpack.c.b16 %v275, %v274
        %v289 = vpack.c.b16 %v277, %v276
        %v290 = vpack.c.b16 %v279, %v278
        %v291 = vpack.c.b16 %v281, %v280
        %v292 = vpack.c.b16 %v283, %v282
        %v293 = vpack.c.b16 %v285, %v284
        %v298 = vunpack.c.l.b16 %v243
        %v299 = vunpack.c.l.b16 %v244
        %v300 = vunpack.c.l.b16 %v245
        %v301 = vunpack.c.l.b16 %v246
        %v302 = vpack.c.b16 %v299, %v298
        %v303 = vpack.c.b16 %v301, %v300
        %vm306 = vcmask 261120
        %v308 = vsel %vm306, %v286, 0
        %v311 = vsel %vm306, %v287, 0
        %v314 = vsel %vm306, %v288, 0
        %v317 = vsel %vm306, %v289, 0
        %v320 = vsel %vm306, %v290, 0
        %v323 = vsel %vm306, %v291, 0
        %v326 = vsel %vm306, %v292, 0
        %v329 = vsel %vm306, %v293, 0
        %331 = vmatprep.subr.bf16.mxu0 0
        %332 = vmatpush1.bf16.msra.mxu0 %v302
        %333 = vmatprep.subr.bf16.mxu0 0
        %334 = vmatpush1.bf16.msra.mxu0 %v303
        %335 = vmatprep.subr.bf16.mxu0 0
        %336 = vmatpush1.bf16.msra.mxu0 0
        %337 = vmatprep.subr.bf16.mxu0 0
        %338 = vmatpush1.bf16.msra.mxu0 0
        %339 = vmatprep.subr.bf16.mxu0 0
        %340 = vmatpush1.bf16.msra.mxu0 0
        %341 = vmatprep.subr.bf16.mxu0 0
        %342 = vmatpush1.bf16.msra.mxu0 0
        %343 = vmatprep.subr.bf16.mxu0 0
        %344 = vmatpush1.bf16.msra.mxu0 0
        %345 = vmatprep.subr.bf16.mxu0 0
        %346 = vmatpush1.bf16.msra.mxu0 0
        %347 = vmatprep.subr.bf16.mxu0 0
        %348 = vmatpush1.bf16.msra.mxu0 0
        %349 = vmatprep.subr.bf16.mxu0 0
        %350 = vmatpush1.bf16.msra.mxu0 0
        %351 = vmatprep.subr.bf16.mxu0 0
        %352 = vmatpush1.bf16.msra.mxu0 0
        %353 = vmatprep.subr.bf16.mxu0 0
        %354 = vmatpush1.bf16.msra.mxu0 0
        %355 = vmatprep.subr.bf16.mxu0 0
        %356 = vmatpush1.bf16.msra.mxu0 0
        %357 = vmatprep.subr.bf16.mxu0 0
        %358 = vmatpush1.bf16.msra.mxu0 0
        %359 = vmatprep.subr.bf16.mxu0 0
        %360 = vmatpush1.bf16.msra.mxu0 0
        %361 = vmatprep.subr.bf16.mxu0 0
        %362 = vmatpush1.bf16.msra.mxu0 0
        %363 = vmatprep.mubr.bf16.mxu0 0
        %364 = vmatmul.mubr.bf16.gmra.mrb[0].mxu0 %v308
        %v365 = vpop.f32.mrb[0].mxu0
        %v366 = vadd.f32 %v252, %v365
        %v367 = vpop.f32.mrb[0].mxu0
        %v368 = vpop.f32.mrb[0].mxu0
        %v369 = vadd.f32 %v252, %v368
        %v370 = vpop.f32.mrb[0].mxu0
        %371 = vmatprep.mubr.bf16.mxu0 0
        %372 = vmatmul.mubr.bf16.gmra.mrb[0].mxu0 %v311
        %v373 = vpop.f32.mrb[0].mxu0
        %v374 = vadd.f32 %v252, %v373
        %v375 = vpop.f32.mrb[0].mxu0
        %v376 = vpop.f32.mrb[0].mxu0
        %v377 = vadd.f32 %v252, %v376
        %v378 = vpop.f32.mrb[0].mxu0
        %379 = vmatprep.mubr.bf16.mxu0 0
        %380 = vmatmul.mubr.bf16.gmra.mrb[0].mxu0 %v314
        %v381 = vpop.f32.mrb[0].mxu0
        %v382 = vadd.f32 %v252, %v381
        %v383 = vpop.f32.mrb[0].mxu0
        %v384 = vpop.f32.mrb[0].mxu0
        %v385 = vadd.f32 %v252, %v384
        %v386 = vpop.f32.mrb[0].mxu0
        %387 = vmatprep.mubr.bf16.mxu0 0
        %388 = vmatmul.mubr.bf16.gmra.mrb[0].mxu0 %v317
        %v389 = vpop.f32.mrb[0].mxu0
        %v390 = vadd.f32 %v252, %v389
        %v391 = vpop.f32.mrb[0].mxu0
        %v392 = vpop.f32.mrb[0].mxu0
        %v393 = vadd.f32 %v252, %v392
        %v394 = vpop.f32.mrb[0].mxu0
        %395 = vmatprep.mubr.bf16.mxu0 0
        %396 = vmatmul.mubr.bf16.gmra.mrb[0].mxu0 %v320
        %v397 = vpop.f32.mrb[0].mxu0
        %v398 = vadd.f32 %v252, %v397
        %v399 = vpop.f32.mrb[0].mxu0
        %v400 = vpop.f32.mrb[0].mxu0
        %v401 = vadd.f32 %v252, %v400
        %v402 = vpop.f32.mrb[0].mxu0
        %403 = vmatprep.mubr.bf16.mxu0 0
        %404 = vmatmul.mubr.bf16.gmra.mrb[0].mxu0 %v323
        %v405 = vpop.f32.mrb[0].mxu0
        %v406 = vadd.f32 %v252, %v405
        %v407 = vpop.f32.mrb[0].mxu0
        %v408 = vpop.f32.mrb[0].mxu0
        %v409 = vadd.f32 %v252, %v408
        %v410 = vpop.f32.mrb[0].mxu0
        %411 = vmatprep.mubr.bf16.mxu0 0
        %412 = vmatmul.mubr.bf16.gmra.mrb[0].mxu0 %v326
        %v413 = vpop.f32.mrb[0].mxu0
        %v414 = vadd.f32 %v252, %v413
        %v415 = vpop.f32.mrb[0].mxu0
        %v416 = vpop.f32.mrb[0].mxu0
        %v417 = vadd.f32 %v252, %v416
        %v418 = vpop.f32.mrb[0].mxu0
        %419 = vmatprep.mubr.bf16.mxu0 0
        %420 = vmatmul.mubr.bf16.gmra.mrb[0].mxu0 %v329
        %v421 = vpop.f32.mrb[0].mxu0
        %v422 = vadd.f32 %v252, %v421
        %v423 = vpop.f32.mrb[0].mxu0
        %v424 = vpop.f32.mrb[0].mxu0
        %v425 = vadd.f32 %v252, %v424
        %v426 = vpop.f32.mrb[0].mxu0
        %427 = vdwg.mxu0
        %v428 = vmax.f32 %v366, 0.0
        %v429 = vmax.f32 %v369, 0.0
        %v430 = vmax.f32 %v374, 0.0
        %v431 = vmax.f32 %v377, 0.0
        %v432 = vmax.f32 %v382, 0.0
        %v433 = vmax.f32 %v385, 0.0
        %v434 = vmax.f32 %v390, 0.0
        %v435 = vmax.f32 %v393, 0.0
        %v436 = vmax.f32 %v398, 0.0
        %v437 = vmax.f32 %v401, 0.0
        %v438 = vmax.f32 %v406, 0.0
        %v439 = vmax.f32 %v409, 0.0
        %v440 = vmax.f32 %v414, 0.0
        %v441 = vmax.f32 %v417, 0.0
        %v442 = vmax.f32 %v422, 0.0
        %v443 = vmax.f32 %v425, 0.0
        %v444 = vld [vmem:[%s3] sm:$0xf]
        %v445 = vld [vmem:[%s3 + $0x4] sm:$0xf]
        %v446 = vld [vmem:[%s3 + $0x8] sm:$0xf]
        %v447 = vld [vmem:[%s3 + $0xc] sm:$0xf]
        %v448 = vld [vmem:[%s3 + $0x10] sm:$0xf]
        %v449 = vld [vmem:[%s3 + $0x14] sm:$0xf]
        %v450 = vld [vmem:[%s3 + $0x18] sm:$0xf]
        %v451 = vld [vmem:[%s3 + $0x1c] sm:$0xf]
        %v452 = vld [vmem:[%s4] sm:$0x1]
        %v453 = vpack.c.bf16 %v429, %v428
        %v454 = vpack.c.bf16 %v431, %v430
        %v455 = vpack.c.bf16 %v433, %v432
        %v456 = vpack.c.bf16 %v435, %v434
        %v457 = vpack.c.bf16 %v437, %v436
        %v458 = vpack.c.bf16 %v439, %v438
        %v459 = vpack.c.bf16 %v441, %v440
        %v460 = vpack.c.bf16 %v443, %v442
        %v462 = vlaneseq
        %v463 = vshrl.u32 %v462, 7
        %v464 = vsub.s32 0, %v463
        %v465 = vrot.slane %v452, %v464
        %v475 = vunpack.c.l.b16 %v444
        %v476 = vunpack.c.l.b16 %v445
        %v477 = vunpack.c.l.b16 %v446
        %v478 = vunpack.c.l.b16 %v447
        %v479 = vunpack.c.l.b16 %v448
        %v480 = vunpack.c.l.b16 %v449
        %v481 = vunpack.c.l.b16 %v450
        %v482 = vunpack.c.l.b16 %v451
        %v483 = vpack.c.b16 %v476, %v475
        %v484 = vpack.c.b16 %v478, %v477
        %v485 = vpack.c.b16 %v480, %v479
        %v486 = vpack.c.b16 %v482, %v481
        %vm491 = vcmask 523264
        %v493 = vsel %vm491, %v453, 0
        %v496 = vsel %vm491, %v454, 0
        %v499 = vsel %vm491, %v455, 0
        %v502 = vsel %vm491, %v456, 0
        %v505 = vsel %vm491, %v457, 0
        %v508 = vsel %vm491, %v458, 0
        %v511 = vsel %vm491, %v459, 0
        %v514 = vsel %vm491, %v460, 0
        %516 = vmatprep.subr.bf16.mxu0 0
        %517 = vmatpush1.bf16.msra.mxu0 %v483
        %518 = vmatprep.subr.bf16.mxu0 0
        %519 = vmatpush1.bf16.msra.mxu0 %v484
        %520 = vmatprep.subr.bf16.mxu0 0
        %521 = vmatpush1.bf16.msra.mxu0 %v485
        %522 = vmatprep.subr.bf16.mxu0 0
        %523 = vmatpush1.bf16.msra.mxu0 %v486
        %524 = vmatprep.subr.bf16.mxu0 0
        %525 = vmatpush1.bf16.msra.mxu0 0
        %526 = vmatprep.subr.bf16.mxu0 0
        %527 = vmatpush1.bf16.msra.mxu0 0
        %528 = vmatprep.subr.bf16.mxu0 0
        %529 = vmatpush1.bf16.msra.mxu0 0
        %530 = vmatprep.subr.bf16.mxu0 0
        %531 = vmatpush1.bf16.msra.mxu0 0
        %532 = vmatprep.subr.bf16.mxu0 0
        %533 = vmatpush1.bf16.msra.mxu0 0
        %534 = vmatprep.subr.bf16.mxu0 0
        %535 = vmatpush1.bf16.msra.mxu0 0
        %536 = vmatprep.subr.bf16.mxu0 0
        %537 = vmatpush1.bf16.msra.mxu0 0
        %538 = vmatprep.subr.bf16.mxu0 0
        %539 = vmatpush1.bf16.msra.mxu0 0
        %540 = vmatprep.subr.bf16.mxu0 0
        %541 = vmatpush1.bf16.msra.mxu0 0
        %542 = vmatprep.subr.bf16.mxu0 0
        %543 = vmatpush1.bf16.msra.mxu0 0
        %544 = vmatprep.subr.bf16.mxu0 0
        %545 = vmatpush1.bf16.msra.mxu0 0
        %546 = vmatprep.subr.bf16.mxu0 0
        %547 = vmatpush1.bf16.msra.mxu0 0
        %548 = vmatprep.mubr.bf16.mxu0 0
        %549 = vmatmul.mubr.bf16.gmra.mrb[0].mxu0 %v493
        %v550 = vpop.f32.mrb[0].mxu0
        %v551 = vadd.f32 %v465, %v550
        %v552 = vpop.f32.mrb[0].mxu0
        %v553 = vpop.f32.mrb[0].mxu0
        %v554 = vadd.f32 %v465, %v553
        %v555 = vpop.f32.mrb[0].mxu0
        %556 = vmatprep.mubr.bf16.mxu0 0
        %557 = vmatmul.mubr.bf16.gmra.mrb[0].mxu0 %v496
        %v558 = vpop.f32.mrb[0].mxu0
        %v559 = vadd.f32 %v465, %v558
        %v560 = vpop.f32.mrb[0].mxu0
        %v561 = vpop.f32.mrb[0].mxu0
        %v562 = vadd.f32 %v465, %v561
        %v563 = vpop.f32.mrb[0].mxu0
        %564 = vmatprep.mubr.bf16.mxu0 0
        %565 = vmatmul.mubr.bf16.gmra.mrb[0].mxu0 %v499
        %v566 = vpop.f32.mrb[0].mxu0
        %v567 = vadd.f32 %v465, %v566
        %v568 = vpop.f32.mrb[0].mxu0
        %v569 = vpop.f32.mrb[0].mxu0
        %v570 = vadd.f32 %v465, %v569
        %v571 = vpop.f32.mrb[0].mxu0
        %572 = vmatprep.mubr.bf16.mxu0 0
        %573 = vmatmul.mubr.bf16.gmra.mrb[0].mxu0 %v502
        %v574 = vpop.f32.mrb[0].mxu0
        %v575 = vadd.f32 %v465, %v574
        %v576 = vpop.f32.mrb[0].mxu0
        %v577 = vpop.f32.mrb[0].mxu0
        %v578 = vadd.f32 %v465, %v577
        %v579 = vpop.f32.mrb[0].mxu0
        %580 = vmatprep.mubr.bf16.mxu0 0
        %581 = vmatmul.mubr.bf16.gmra.mrb[0].mxu0 %v505
        %v582 = vpop.f32.mrb[0].mxu0
        %v583 = vadd.f32 %v465, %v582
        %v584 = vpop.f32.mrb[0].mxu0
        %v585 = vpop.f32.mrb[0].mxu0
        %v586 = vadd.f32 %v465, %v585
        %v587 = vpop.f32.mrb[0].mxu0
        %588 = vmatprep.mubr.bf16.mxu0 0
        %589 = vmatmul.mubr.bf16.gmra.mrb[0].mxu0 %v508
        %v590 = vpop.f32.mrb[0].mxu0
        %v591 = vadd.f32 %v465, %v590
        %v592 = vpop.f32.mrb[0].mxu0
        %v593 = vpop.f32.mrb[0].mxu0
        %v594 = vadd.f32 %v465, %v593
        %v595 = vpop.f32.mrb[0].mxu0
        %596 = vmatprep.mubr.bf16.mxu0 0
        %597 = vmatmul.mubr.bf16.gmra.mrb[0].mxu0 %v511
        %v598 = vpop.f32.mrb[0].mxu0
        %v599 = vadd.f32 %v465, %v598
        %v600 = vpop.f32.mrb[0].mxu0
        %v601 = vpop.f32.mrb[0].mxu0
        %v602 = vadd.f32 %v465, %v601
        %v603 = vpop.f32.mrb[0].mxu0
        %604 = vmatprep.mubr.bf16.mxu0 0
        %605 = vmatmul.mubr.bf16.gmra.mrb[0].mxu0 %v514
        %v606 = vpop.f32.mrb[0].mxu0
        %v607 = vadd.f32 %v465, %v606
        %v608 = vpop.f32.mrb[0].mxu0
        %v609 = vpop.f32.mrb[0].mxu0
        %v610 = vadd.f32 %v465, %v609
        %v611 = vpop.f32.mrb[0].mxu0
        %612 = vdwg.mxu0
        %v613 = vxor.u32 %v551, 2147483648
        %v614 = vxor.u32 %v554, 2147483648
        %v615 = vxor.u32 %v559, 2147483648
        %v616 = vxor.u32 %v562, 2147483648
        %v617 = vxor.u32 %v567, 2147483648
        %v618 = vxor.u32 %v570, 2147483648
        %v619 = vxor.u32 %v575, 2147483648
        %v620 = vxor.u32 %v578, 2147483648
        %v621 = vxor.u32 %v583, 2147483648
        %v622 = vxor.u32 %v586, 2147483648
        %v623 = vxor.u32 %v591, 2147483648
        %v624 = vxor.u32 %v594, 2147483648
        %v625 = vxor.u32 %v599, 2147483648
        %v626 = vxor.u32 %v602, 2147483648
        %v627 = vxor.u32 %v607, 2147483648
        %v628 = vxor.u32 %v610, 2147483648
        %v629 = vmul.f32 %v613, 1.442695
        %v630 = vpow.pop %v629
        %v631 = vmul.f32 %v614, 1.442695
        %v632 = vpow.pop %v631
        %v633 = vmul.f32 %v615, 1.442695
        %v634 = vpow.pop %v633
        %v635 = vmul.f32 %v616, 1.442695
        %v636 = vpow.pop %v635
        %v637 = vmul.f32 %v617, 1.442695
        %v638 = vpow.pop %v637
        %v639 = vmul.f32 %v618, 1.442695
        %v640 = vpow.pop %v639
        %v641 = vmul.f32 %v619, 1.442695
        %v642 = vpow.pop %v641
        %v643 = vmul.f32 %v620, 1.442695
        %v644 = vpow.pop %v643
        %v645 = vmul.f32 %v621, 1.442695
        %v646 = vpow.pop %v645
        %v647 = vmul.f32 %v622, 1.442695
        %v648 = vpow.pop %v647
        %v649 = vmul.f32 %v623, 1.442695
        %v650 = vpow.pop %v649
        %v651 = vmul.f32 %v624, 1.442695
        %v652 = vpow.pop %v651
        %v653 = vmul.f32 %v625, 1.442695
        %v654 = vpow.pop %v653
        %v655 = vmul.f32 %v626, 1.442695
        %v656 = vpow.pop %v655
        %v657 = vmul.f32 %v627, 1.442695
        %v658 = vpow.pop %v657
        %v659 = vmul.f32 %v628, 1.442695
        %v660 = vpow.pop %v659
        %v661 = vadd.f32 %v630, 1.0
        %v662 = vadd.f32 %v632, 1.0
        %v663 = vadd.f32 %v634, 1.0
        %v664 = vadd.f32 %v636, 1.0
        %v665 = vadd.f32 %v638, 1.0
        %v666 = vadd.f32 %v640, 1.0
        %v667 = vadd.f32 %v642, 1.0
        %v668 = vadd.f32 %v644, 1.0
        %v669 = vadd.f32 %v646, 1.0
        %v670 = vadd.f32 %v648, 1.0
        %v671 = vadd.f32 %v650, 1.0
        %v672 = vadd.f32 %v652, 1.0
        %v673 = vadd.f32 %v654, 1.0
        %v674 = vadd.f32 %v656, 1.0
        %v675 = vadd.f32 %v658, 1.0
        %v676 = vadd.f32 %v660, 1.0
        %v677 = vrcp.pop %v661
        %v678 = vmul.f32 1.0, %v677
        %v679 = vrcp.pop %v662
        %v680 = vmul.f32 1.0, %v679
        %v681 = vrcp.pop %v663
        %v682 = vmul.f32 1.0, %v681
        %v683 = vrcp.pop %v664
        %v684 = vmul.f32 1.0, %v683
        %v685 = vrcp.pop %v665
        %v686 = vmul.f32 1.0, %v685
        %v687 = vrcp.pop %v666
        %v688 = vmul.f32 1.0, %v687
        %v689 = vrcp.pop %v667
        %v690 = vmul.f32 1.0, %v689
        %v691 = vrcp.pop %v668
        %v692 = vmul.f32 1.0, %v691
        %v693 = vrcp.pop %v669
        %v694 = vmul.f32 1.0, %v693
        %v695 = vrcp.pop %v670
        %v696 = vmul.f32 1.0, %v695
        %v697 = vrcp.pop %v671
        %v698 = vmul.f32 1.0, %v697
        %v699 = vrcp.pop %v672
        %v700 = vmul.f32 1.0, %v699
        %v701 = vrcp.pop %v673
        %v702 = vmul.f32 1.0, %v701
        %v703 = vrcp.pop %v674
        %v704 = vmul.f32 1.0, %v703
        %v705 = vrcp.pop %v675
        %v706 = vmul.f32 1.0, %v705
        %v707 = vrcp.pop %v676
        %v708 = vmul.f32 1.0, %v707
        %709 = vst [vmem:[%s218] sm:$0xff] %v678
        %710 = vst [vmem:[%s218 + $0x8] sm:$0xff] %v680
        %711 = vst [vmem:[%s218 + $0x10] sm:$0xff] %v682
        %712 = vst [vmem:[%s218 + $0x18] sm:$0xff] %v684
        %713 = vst [vmem:[%s218 + $0x20] sm:$0xff] %v686
        %714 = vst [vmem:[%s218 + $0x28] sm:$0xff] %v688
        %715 = vst [vmem:[%s218 + $0x30] sm:$0xff] %v690
        %716 = vst [vmem:[%s218 + $0x38] sm:$0xff] %v692
        %717 = vst [vmem:[%s218 + $0x40] sm:$0xff] %v694
        %718 = vst [vmem:[%s218 + $0x48] sm:$0xff] %v696
        %719 = vst [vmem:[%s218 + $0x50] sm:$0xff] %v698
        %720 = vst [vmem:[%s218 + $0x58] sm:$0xff] %v700
        %721 = vst [vmem:[%s218 + $0x60] sm:$0xff] %v702
        %722 = vst [vmem:[%s218 + $0x68] sm:$0xff] %v704
        %723 = vst [vmem:[%s218 + $0x70] sm:$0xff] %v706
        %724 = vst [vmem:[%s218 + $0x78] sm:$0xff] %v708
        %s725 = sand.u32 %s137, 1
        %s726 = scalar_lea.sflag [#allocation3], %s725
        %s727 = sand.u32 %s137, 1
        %s728 = smul.addr %s727, 128
        %s729 = scalar_lea.vmem [#allocation2], %s728
        // Predicated region
        $region41: #{decoder_forward.1} parent=39 // pred_check
          %p730 = pneg %p147
        $region42: #{decoder_forward.1} parent=39 // pred_check_branch
          %732 = sbr.rel (%p730) target = $region44
        $region43: #{decoder_forward.1} parent=39 // pred_region
          %s733 = smul.u32 16, %s19
          %s735 = ssub.s32 2048, 2048
          %736 = vsyncadd %s726, %s735
          %s737 = smul.addr %s733, 128
          %s738 = scalar_lea.hbm %s5, %s737
          %s739 = sshll.u32 %s729, 4
          %s740 = int_to_ptr.vmem [resolvable:$true] %s739
          %745 = dma.vmem_to_hbm [thread:$0]  %s740, 2048, %s738, %s726, 128, 128, 8
        $region44: #{decoder_forward.1} parent=39 // pred_fallthru
          _
      $region40: #{decoder_forward.1} parent=5 // pred_fallthru
        _
      %p746 = scmp.le.s32.totalorder 2, %s14
      // Predicated region
      $region45: #{decoder_forward.1} parent=5 // pred_check
        %p747 = pneg %p746
      $region46: #{decoder_forward.1} parent=5 // pred_check_branch
        %749 = sbr.rel (%p747) target = $region48
      $region47: #{decoder_forward.1} parent=5 // pred_region
        %s750 = ssub.s32 %s14, 2
        // Predicated region
        $region49: #{decoder_forward.1} parent=47 // pred_check
          %p751 = pneg %p153
        $region50: #{decoder_forward.1} parent=47 // pred_check_branch
          %753 = sbr.rel (%p751) target = $region52
        $region51: #{decoder_forward.1} parent=47 // pred_region
          %s754 = sand.u32 %s138, 1
          %s755 = scalar_lea.sflag [#allocation3], %s754
          %s756 = sand.u32 %s138, 1
          %s757 = smul.addr %s756, 128
          %s758 = scalar_lea.vmem [#allocation2], %s757
          %759 = dma.done %s755, 2048
        $region52: #{decoder_forward.1} parent=47 // pred_fallthru
          _
      $region48: #{decoder_forward.1} parent=5 // pred_fallthru
        _
    $region6: #{decoder_forward.1} parent=1 // loop_footer
      %s18 = sadd.s32 1, %s14
    $region7: #{decoder_forward.1} parent=1 // loop_footer_branch
      %13 = sbr.rel target = $region3
    $region8: #{decoder_forward.1} parent=1 // loop_exit
      _
    %760 = vsyncpa [#allocation3], 1
    %s761 = scalar_lea.sflag [#allocation3], 1
    %762 = vsyncpa %s761, 1

</llo_original>
